<compile_context>
chip_gen: v5e
topology: v5e:2x2
jax: 0.10.0
libtpu: 0.0.40
codegen_flags: <defaults>
</compile_context>

<pallas_src>
import functools

import jax
import jax.numpy as jnp
from jax import lax
from jax.experimental import pallas as pl
from jax.experimental.pallas import tpu as pltpu


# ----------------------------------------------------------------------------
# Kernel: one (batch, H-tile) slab per grid step.
# ----------------------------------------------------------------------------
def dark_unit_kernel(x_ref, xh_ref, w1_ref, b1_ref, w3_ref, b3_ref, o_ref,
                     xpad_ref, mid_ref, *, alpha):
    # x_ref   : (1, TH, W*Cin)       current row-tile, f32
    # xh_ref  : (1, 1, 2, W*Cin)     [row above tile, row below tile], f32
    # w1_ref  : (W*Cin, W*Cmid)      block-diagonal folded conv1 weight, bf16
    # b1_ref  : (1, W*Cmid)          folded conv1 bias tiled over W, f32
    # w3_ref  : (3, W*Cmid, W*Cout)  banded folded conv3 weight per dh tap, bf16
    # b3_ref  : (1, W*Cout)          folded conv3 bias tiled over W, f32
    # o_ref   : (1, TH, W*Cout)
    # xpad_ref: (TH+2, W*Cin)        VMEM scratch: x tile + 1 halo row each side
    # mid_ref : (TH+2, W*Cmid)       VMEM scratch: mid + 1 halo row each side
    h_idx = pl.program_id(1)
    n_h = pl.num_programs(1)

    TH = x_ref.shape[1]
    WCin = x_ref.shape[2]
    WCmid = mid_ref.shape[1]

    x = x_ref[0]                                     # (TH, WCin) f32
    xh = xh_ref[...].reshape(2, WCin)                # (2,  WCin) f32

    # Assemble padded input slab [halo_above; x; halo_below] in VMEM scratch.
    xpad_ref[pl.ds(1, TH), :] = x
    xpad_ref[pl.ds(0, 1), :] = xh[0:1, :]
    xpad_ref[pl.ds(TH + 1, 1), :] = xh[1:2, :]

    # conv1x1 + BN + LeakyReLU on the whole padded slab: ONE MXU matmul.
    m = jnp.dot(xpad_ref[...].astype(jnp.bfloat16), w1_ref[...],
                preferred_element_type=jnp.float32)
    m = m + b1_ref[...]
    mid_ref[...] = jnp.where(m >= 0, m, alpha * m)   # LeakyReLU

    # Halo rows outside the image are the 3x3 conv's zero padding (applied
    # AFTER conv1 + activation, matching the reference) -> zero them in place.
    @pl.when(h_idx == 0)
    def _():
        mid_ref[pl.ds(0, 1), :] = jnp.zeros((1, WCmid), jnp.float32)

    @pl.when(h_idx == n_h - 1)
    def _():
        mid_ref[pl.ds(TH + 1, 1), :] = jnp.zeros((1, WCmid), jnp.float32)

    # conv3x3: three dh taps, each a single matmul against a banded weight
    # (dw shift + W zero-pad folded in).  K = W*Cmid, N = W*Cout, M = TH.
    out = jnp.dot(mid_ref[pl.ds(0, TH), :].astype(jnp.bfloat16), w3_ref[0],
                  preferred_element_type=jnp.float32)
    out = out + jnp.dot(mid_ref[pl.ds(1, TH), :].astype(jnp.bfloat16),
                        w3_ref[1], preferred_element_type=jnp.float32)
    out = out + jnp.dot(mid_ref[pl.ds(2, TH), :].astype(jnp.bfloat16),
                        w3_ref[2], preferred_element_type=jnp.float32)
    out = out + b3_ref[...]
    out = jnp.where(out >= 0, out, alpha * out)      # LeakyReLU

    # Residual add (Cin == Cout, so the W-folded layouts line up elementwise).
    o_ref[0] = (out + x).astype(o_ref.dtype)


# ----------------------------------------------------------------------------
# Wrapper
# ----------------------------------------------------------------------------
def dark_unit(x, w1, b1, w3, b3, *, alpha, block_h=None):
    """x: (N, H, W, Cin) f32 NHWC.
       w1: (Cin, Cmid) BN-folded conv1 weight.  b1: (Cmid,) folded bias.
       w3: (3, 3, Cmid, Cout) BN-folded conv3 weight (HWIO).  b3: (Cout,).
       Requires Cin == Cout (residual)."""
    N, H, W, Cin = x.shape
    Cmid = w1.shape[1]
    Cout = w3.shape[3]
    assert w1.shape[0] == Cin
    assert Cin == Cout, "DarkUnit residual requires in_channels == out_channels"

    if block_h is None:
        block_h = H
        for cand in (256, 128, 64, 32, 16, 8):   # biggest tile that fits VMEM
            if H % cand == 0:
                block_h = cand
                break
    assert H % block_h == 0
    assert block_h == H or block_h % 8 == 0
    n_h = H // block_h

    WCin, WCmid, WCout = W * Cin, W * Cmid, W * Cout

    # ---- precompute weights in exactly the layout the kernel consumes ----
    # conv1x1 as block-diagonal (W*Cin, W*Cmid): lane-dense single matmul.
    w1bd = jnp.kron(jnp.eye(W, dtype=w1.dtype), w1).astype(jnp.bfloat16)
    b1t = jnp.tile(b1.reshape(-1), W).reshape(1, WCmid).astype(jnp.float32)

    # conv3x3: per-dh banded (W*Cmid, W*Cout) weights.  The band encodes the
    # dw shift and the zero padding along W.
    dw = jnp.arange(3)
    wi = jnp.arange(W)
    wo = jnp.arange(W)
    sel = (wi[None, :, None] == wo[None, None, :] + dw[:, None, None] - 1)
    sel = sel.astype(w3.dtype)                            # (3, W, W)
    w3b = jnp.einsum('dio,hdmc->himoc', sel, w3)          # (3, W, Cmid, W, Cout)
    w3b = w3b.reshape(3, WCmid, WCout).astype(jnp.bfloat16)
    b3t = jnp.tile(b3.reshape(-1), W).reshape(1, WCout).astype(jnp.float32)

    # ---- fold W into the lane axis and build the 1-row halo slabs ----
    xf = x.reshape(N, H, WCin)
    xt = xf.reshape(N, n_h, block_h, WCin)
    zero = jnp.zeros((N, 1, WCin), xf.dtype)
    above = jnp.concatenate([zero, xt[:, :-1, -1, :]], axis=1)   # (N, n_h, WCin)
    below = jnp.concatenate([xt[:, 1:, 0, :], zero], axis=1)     # (N, n_h, WCin)
    x_halo = jnp.stack([above, below], axis=2)                   # (N, n_h, 2, WCin)

    kern = functools.partial(dark_unit_kernel, alpha=alpha)
    out_flat = pl.pallas_call(
        kern,
        out_shape=jax.ShapeDtypeStruct((N, H, WCout), x.dtype),
        grid_spec=pltpu.PrefetchScalarGridSpec(
            num_scalar_prefetch=0,
            grid=(N, n_h),
            in_specs=[
                pl.BlockSpec((1, block_h, WCin), lambda n, h: (n, h, 0)),
                pl.BlockSpec((1, 1, 2, WCin), lambda n, h: (n, h, 0, 0)),
                pl.BlockSpec((WCin, WCmid), lambda n, h: (0, 0)),
                pl.BlockSpec((1, WCmid), lambda n, h: (0, 0)),
                pl.BlockSpec((3, WCmid, WCout), lambda n, h: (0, 0, 0)),
                pl.BlockSpec((1, WCout), lambda n, h: (0, 0)),
            ],
            out_specs=pl.BlockSpec((1, block_h, WCout), lambda n, h: (n, h, 0)),
            scratch_shapes=[
                pltpu.VMEM((block_h + 2, WCin), jnp.float32),   # padded x slab
                pltpu.VMEM((block_h + 2, WCmid), jnp.float32),  # padded mid slab
            ],
        ),
        compiler_params=pltpu.CompilerParams(
            dimension_semantics=("parallel", "parallel")),
    )(xf, x_halo, w1bd, b1t, w3b, b3t)
    return out_flat.reshape(N, H, W, Cout)


# ----------------------------------------------------------------------------
# Deterministic synthetic parameters (BN folded, eval mode)
# ----------------------------------------------------------------------------
def make_params(key, in_channels, out_channels):
    assert out_channels % 2 == 0
    mid_channels = out_channels // 2
    eps = 1e-5
    ks = jax.random.split(key, 10)

    # conv1x1: PyTorch weight shape (Cmid, Cin, 1, 1), no conv bias
    w1_t = 0.1 * jax.random.normal(ks[0], (mid_channels, in_channels, 1, 1),
                                   jnp.float32)
    g1 = 1.0 + 0.1 * jax.random.normal(ks[1], (mid_channels,), jnp.float32)
    be1 = 0.1 * jax.random.normal(ks[2], (mid_channels,), jnp.float32)
    m1 = 0.1 * jax.random.normal(ks[3], (mid_channels,), jnp.float32)
    v1 = jnp.abs(jax.random.normal(ks[4], (mid_channels,), jnp.float32)) + 0.5

    # conv3x3: PyTorch weight shape (Cout, Cmid, 3, 3), no conv bias
    w3_t = 0.1 * jax.random.normal(ks[5], (out_channels, mid_channels, 3, 3),
                                   jnp.float32)
    g2 = 1.0 + 0.1 * jax.random.normal(ks[6], (out_channels,), jnp.float32)
    be2 = 0.1 * jax.random.normal(ks[7], (out_channels,), jnp.float32)
    m2 = 0.1 * jax.random.normal(ks[8], (out_channels,), jnp.float32)
    v2 = jnp.abs(jax.random.normal(ks[9], (out_channels,), jnp.float32)) + 0.5

    # Fold BN (eval mode) into conv weights / biases.
    s1 = g1 / jnp.sqrt(v1 + eps)                                    # (Cmid,)
    w1 = jnp.transpose(w1_t[:, :, 0, 0], (1, 0)) * s1[None, :]      # (Cin, Cmid)
    b1 = be1 - m1 * s1                                              # (Cmid,)

    s2 = g2 / jnp.sqrt(v2 + eps)                                    # (Cout,)
    w3 = jnp.transpose(w3_t, (2, 3, 1, 0)) * s2[None, None, None, :]  # (3,3,Cmid,Cout)
    b3 = be2 - m2 * s2                                              # (Cout,)
    return w1, b1, w3, b3


# ----------------------------------------------------------------------------
# Pure-JAX reference (NHWC convs) for correctness check
# ----------------------------------------------------------------------------
def dark_unit_ref(x, w1, b1, w3, b3, *, alpha):
    dn = ('NHWC', 'HWIO', 'NHWC')
    mid = lax.conv_general_dilated(x, w1.reshape(1, 1, *w1.shape),
                                   (1, 1), 'VALID', dimension_numbers=dn)
    mid = mid + b1.reshape(1, 1, 1, -1)
    mid = jnp.where(mid >= 0, mid, alpha * mid)
    out = lax.conv_general_dilated(mid, w3, (1, 1), 'SAME',
                                   dimension_numbers=dn)
    out = out + b3.reshape(1, 1, 1, -1)
    out = jnp.where(out >= 0, out, alpha * out)
    return out + x


if __name__ == "__main__":
    N, C, H, W = 2, 8, 16, 16       # W*C = 128 -> fully lane-dense folded layout
    alpha = 0.1
    block_h = 8                     # 2 H-tiles per image -> grid (2, 2), tests halos

    key = jax.random.PRNGKey(0)
    kx, kp = jax.random.split(key)
    x = jax.random.normal(kx, (N, H, W, C), jnp.float32)   # layout: NHWC
    w1, b1, w3, b3 = make_params(kp, C, C)

    out = dark_unit(x, w1, b1, w3, b3, alpha=alpha, block_h=block_h)
    out = jax.block_until_ready(out)

    ref = dark_unit_ref(x, w1, b1, w3, b3, alpha=alpha)
    assert out.shape == (N, H, W, C)
    err = float(jnp.max(jnp.abs(out - ref)))
    assert err < 2e-2, f"mismatch vs reference: {err}"   # bf16-MXU tolerance

    print("KERNEL_OK")
</pallas_src>

<mosaic_0001>
module attributes {stable_mosaic.version = 11 : i64} {
  func.func @dark_unit_kernel(%arg0: i32, %arg1: i32, %arg2: memref<1x8x128xf32, #tpu.memory_space<vmem>>, %arg3: memref<1x1x2x128xf32, #tpu.memory_space<vmem>>, %arg4: memref<128x64xbf16, #tpu.memory_space<vmem>>, %arg5: memref<1x64xf32, #tpu.memory_space<vmem>>, %arg6: memref<3x64x128xbf16, #tpu.memory_space<vmem>>, %arg7: memref<1x128xf32, #tpu.memory_space<vmem>>, %arg8: memref<1x8x128xf32, #tpu.memory_space<vmem>>, %arg9: memref<10x128xf32, #tpu.memory_space<vmem>>, %arg10: memref<10x64xf32, #tpu.memory_space<vmem>>) attributes {dimension_semantics = [#tpu.dimension_semantics<parallel>, #tpu.dimension_semantics<parallel>], iteration_bounds = array<i64: 2, 2>, scalar_prefetch = 0 : i64, scratch_operands = 2 : i64, tpu.core_type = #tpu.core_type<tc>, window_params = [{transform_indices = @transform_0, window_bounds = array<i64: 1, 8, 128>}, {transform_indices = @transform_1, window_bounds = array<i64: 1, 1, 2, 128>}, {pipeline_mode = #tpu.pipeline_mode<synchronous>, transform_indices = @transform_2, window_bounds = array<i64: 128, 64>}, {pipeline_mode = #tpu.pipeline_mode<synchronous>, transform_indices = @transform_3, window_bounds = array<i64: 1, 64>}, {pipeline_mode = #tpu.pipeline_mode<synchronous>, transform_indices = @transform_4, window_bounds = array<i64: 3, 64, 128>}, {pipeline_mode = #tpu.pipeline_mode<synchronous>, transform_indices = @transform_5, window_bounds = array<i64: 1, 128>}, {transform_indices = @transform_6, window_bounds = array<i64: 1, 8, 128>}]} {
    %c0 = arith.constant 0 : index
    %c0_0 = arith.constant 0 : index
    %c0_1 = arith.constant 0 : index
    %0 = vector.load %arg2[%c0, %c0_0, %c0_1] : memref<1x8x128xf32, #tpu.memory_space<vmem>>, vector<1x8x128xf32>
    %1 = vector.shape_cast %0 : vector<1x8x128xf32> to vector<8x128xf32>
    %c0_2 = arith.constant 0 : index
    %c0_3 = arith.constant 0 : index
    %c0_4 = arith.constant 0 : index
    %c0_5 = arith.constant 0 : index
    %2 = vector.load %arg3[%c0_2, %c0_3, %c0_4, %c0_5] : memref<1x1x2x128xf32, #tpu.memory_space<vmem>>, vector<1x1x2x128xf32>
    %3 = vector.shape_cast %2 : vector<1x1x2x128xf32> to vector<2x128xf32>
    %c1 = arith.constant 1 : index
    %c0_6 = arith.constant 0 : index
    %4 = vector.load %arg9[%c1, %c0_6] : memref<10x128xf32, #tpu.memory_space<vmem>>, vector<8x128xf32>
    tpu.vector_store %arg9[%c1, %c0_6], %1 {strides = array<i32>} : memref<10x128xf32, #tpu.memory_space<vmem>>, vector<8x128xf32>,
    %5 = vector.extract_strided_slice %3 {offsets = [0, 0], sizes = [1, 128], strides = [1, 1]} : vector<2x128xf32> to vector<1x128xf32>
    %c0_7 = arith.constant 0 : index
    %c0_8 = arith.constant 0 : index
    %6 = vector.load %arg9[%c0_7, %c0_8] : memref<10x128xf32, #tpu.memory_space<vmem>>, vector<1x128xf32>
    tpu.vector_store %arg9[%c0_7, %c0_8], %5 {strides = array<i32>} : memref<10x128xf32, #tpu.memory_space<vmem>>, vector<1x128xf32>,
    %7 = vector.extract_strided_slice %3 {offsets = [1, 0], sizes = [1, 128], strides = [1, 1]} : vector<2x128xf32> to vector<1x128xf32>
    %c9 = arith.constant 9 : index
    %c0_9 = arith.constant 0 : index
    %8 = vector.load %arg9[%c9, %c0_9] : memref<10x128xf32, #tpu.memory_space<vmem>>, vector<1x128xf32>
    tpu.vector_store %arg9[%c9, %c0_9], %7 {strides = array<i32>} : memref<10x128xf32, #tpu.memory_space<vmem>>, vector<1x128xf32>,
    %c0_10 = arith.constant 0 : index
    %c0_11 = arith.constant 0 : index
    %9 = vector.load %arg9[%c0_10, %c0_11] : memref<10x128xf32, #tpu.memory_space<vmem>>, vector<10x128xf32>
    %10 = arith.truncf %9 : vector<10x128xf32> to vector<10x128xbf16>
    %c0_12 = arith.constant 0 : index
    %c0_13 = arith.constant 0 : index
    %11 = vector.load %arg4[%c0_12, %c0_13] : memref<128x64xbf16, #tpu.memory_space<vmem>>, vector<128x64xbf16>
    %cst = arith.constant dense<0.000000e+00> : vector<10x64xf32>
    %12 = tpu.matmul %10, %11, %cst {dimension_numbers = #tpu.dot_dimension_numbers<[1], [0], [0], [1], [0, 0, 1, 1], [], []>} : vector<10x128xbf16>, vector<128x64xbf16>, vector<10x64xf32> -> vector<10x64xf32>
    %c0_14 = arith.constant 0 : index
    %c0_15 = arith.constant 0 : index
    %13 = vector.load %arg5[%c0_14, %c0_15] : memref<1x64xf32, #tpu.memory_space<vmem>>, vector<1x64xf32>
    %14 = vector.broadcast %13 : vector<1x64xf32> to vector<10x64xf32>
    %15 = arith.addf %12, %14 : vector<10x64xf32>
    %cst_16 = arith.constant 0.000000e+00 : f32
    %16 = vector.broadcast %cst_16 : f32 to vector<10x64xf32>
    %17 = arith.cmpf oge, %15, %16 : vector<10x64xf32>
    %cst_17 = arith.constant 1.000000e-01 : f32
    %18 = vector.broadcast %cst_17 : f32 to vector<10x64xf32>
    %19 = arith.mulf %18, %15 : vector<10x64xf32>
    %20 = arith.select %17, %15, %19 : vector<10x64xi1>, vector<10x64xf32>
    %c0_18 = arith.constant 0 : index
    %c0_19 = arith.constant 0 : index
    %21 = vector.load %arg10[%c0_18, %c0_19] : memref<10x64xf32, #tpu.memory_space<vmem>>, vector<10x64xf32>
    tpu.vector_store %arg10[%c0_18, %c0_19], %20 {strides = array<i32>} : memref<10x64xf32, #tpu.memory_space<vmem>>, vector<10x64xf32>,
    %c0_i32 = arith.constant 0 : i32
    %22 = arith.cmpi eq, %arg1, %c0_i32 : i32
    %23 = arith.extui %22 : i1 to i32
    %c0_i32_20 = arith.constant 0 : i32
    %24 = arith.cmpi ne, %23, %c0_i32_20 : i32
    scf.if %24 {
      %cst_46 = arith.constant 0.000000e+00 : f32
      %57 = vector.broadcast %cst_46 : f32 to vector<1x64xf32>
      %c0_47 = arith.constant 0 : index
      %c0_48 = arith.constant 0 : index
      %58 = vector.load %arg10[%c0_47, %c0_48] : memref<10x64xf32, #tpu.memory_space<vmem>>, vector<1x64xf32>
      tpu.vector_store %arg10[%c0_47, %c0_48], %57 {strides = array<i32>} : memref<10x64xf32, #tpu.memory_space<vmem>>, vector<1x64xf32>,
    } else {
    }
    %c1_i32 = arith.constant 1 : i32
    %25 = arith.cmpi eq, %arg1, %c1_i32 : i32
    %26 = arith.extui %25 : i1 to i32
    %c0_i32_21 = arith.constant 0 : i32
    %27 = arith.cmpi ne, %26, %c0_i32_21 : i32
    scf.if %27 {
      %cst_46 = arith.constant 0.000000e+00 : f32
      %57 = vector.broadcast %cst_46 : f32 to vector<1x64xf32>
      %c9_47 = arith.constant 9 : index
      %c0_48 = arith.constant 0 : index
      %58 = vector.load %arg10[%c9_47, %c0_48] : memref<10x64xf32, #tpu.memory_space<vmem>>, vector<1x64xf32>
      tpu.vector_store %arg10[%c9_47, %c0_48], %57 {strides = array<i32>} : memref<10x64xf32, #tpu.memory_space<vmem>>, vector<1x64xf32>,
    } else {
    }
    %c0_22 = arith.constant 0 : index
    %c0_23 = arith.constant 0 : index
    %28 = vector.load %arg10[%c0_22, %c0_23] : memref<10x64xf32, #tpu.memory_space<vmem>>, vector<8x64xf32>
    %29 = arith.truncf %28 : vector<8x64xf32> to vector<8x64xbf16>
    %c0_24 = arith.constant 0 : index
    %c0_25 = arith.constant 0 : index
    %c0_26 = arith.constant 0 : index
    %30 = vector.load %arg6[%c0_24, %c0_25, %c0_26] : memref<3x64x128xbf16, #tpu.memory_space<vmem>>, vector<1x64x128xbf16>
    %31 = vector.shape_cast %30 : vector<1x64x128xbf16> to vector<64x128xbf16>
    %cst_27 = arith.constant dense<0.000000e+00> : vector<8x128xf32>
    %32 = tpu.matmul %29, %31, %cst_27 {dimension_numbers = #tpu.dot_dimension_numbers<[1], [0], [0], [1], [0, 0, 1, 1], [], []>} : vector<8x64xbf16>, vector<64x128xbf16>, vector<8x128xf32> -> vector<8x128xf32>
    %c1_28 = arith.constant 1 : index
    %c0_29 = arith.constant 0 : index
    %33 = vector.load %arg10[%c1_28, %c0_29] : memref<10x64xf32, #tpu.memory_space<vmem>>, vector<8x64xf32>
    %34 = arith.truncf %33 : vector<8x64xf32> to vector<8x64xbf16>
    %c1_30 = arith.constant 1 : index
    %c0_31 = arith.constant 0 : index
    %c0_32 = arith.constant 0 : index
    %35 = vector.load %arg6[%c1_30, %c0_31, %c0_32] : memref<3x64x128xbf16, #tpu.memory_space<vmem>>, vector<1x64x128xbf16>
    %36 = vector.shape_cast %35 : vector<1x64x128xbf16> to vector<64x128xbf16>
    %cst_33 = arith.constant dense<0.000000e+00> : vector<8x128xf32>
    %37 = tpu.matmul %34, %36, %cst_33 {dimension_numbers = #tpu.dot_dimension_numbers<[1], [0], [0], [1], [0, 0, 1, 1], [], []>} : vector<8x64xbf16>, vector<64x128xbf16>, vector<8x128xf32> -> vector<8x128xf32>
    %38 = arith.addf %32, %37 : vector<8x128xf32>
    %c2 = arith.constant 2 : index
    %c0_34 = arith.constant 0 : index
    %39 = vector.load %arg10[%c2, %c0_34] : memref<10x64xf32, #tpu.memory_space<vmem>>, vector<8x64xf32>
    %40 = arith.truncf %39 : vector<8x64xf32> to vector<8x64xbf16>
    %c2_35 = arith.constant 2 : index
    %c0_36 = arith.constant 0 : index
    %c0_37 = arith.constant 0 : index
    %41 = vector.load %arg6[%c2_35, %c0_36, %c0_37] : memref<3x64x128xbf16, #tpu.memory_space<vmem>>, vector<1x64x128xbf16>
    %42 = vector.shape_cast %41 : vector<1x64x128xbf16> to vector<64x128xbf16>
    %cst_38 = arith.constant dense<0.000000e+00> : vector<8x128xf32>
    %43 = tpu.matmul %40, %42, %cst_38 {dimension_numbers = #tpu.dot_dimension_numbers<[1], [0], [0], [1], [0, 0, 1, 1], [], []>} : vector<8x64xbf16>, vector<64x128xbf16>, vector<8x128xf32> -> vector<8x128xf32>
    %44 = arith.addf %38, %43 : vector<8x128xf32>
    %c0_39 = arith.constant 0 : index
    %c0_40 = arith.constant 0 : index
    %45 = vector.load %arg7[%c0_39, %c0_40] : memref<1x128xf32, #tpu.memory_space<vmem>>, vector<1x128xf32>
    %46 = vector.broadcast %45 : vector<1x128xf32> to vector<8x128xf32>
    %47 = arith.addf %44, %46 : vector<8x128xf32>
    %cst_41 = arith.constant 0.000000e+00 : f32
    %48 = vector.broadcast %cst_41 : f32 to vector<8x128xf32>
    %49 = arith.cmpf oge, %47, %48 : vector<8x128xf32>
    %cst_42 = arith.constant 1.000000e-01 : f32
    %50 = vector.broadcast %cst_42 : f32 to vector<8x128xf32>
    %51 = arith.mulf %50, %47 : vector<8x128xf32>
    %52 = arith.select %49, %47, %51 : vector<8x128xi1>, vector<8x128xf32>
    %53 = arith.addf %52, %1 : vector<8x128xf32>
    %c0_43 = arith.constant 0 : index
    %c0_44 = arith.constant 0 : index
    %c0_45 = arith.constant 0 : index
    %54 = vector.load %arg8[%c0_43, %c0_44, %c0_45] : memref<1x8x128xf32, #tpu.memory_space<vmem>>, vector<1x8x128xf32>
    %55 = vector.shape_cast %54 : vector<1x8x128xf32> to vector<8x128xf32>
    %56 = vector.shape_cast %53 : vector<8x128xf32> to vector<1x8x128xf32>
    tpu.vector_store %arg8[%c0_43, %c0_44, %c0_45], %56 {strides = array<i32>} : memref<1x8x128xf32, #tpu.memory_space<vmem>>, vector<1x8x128xf32>,
    return
  }
  func.func @transform_0(%arg0: i32, %arg1: i32) -> (i32, i32, i32) {
    %c0_i32 = arith.constant 0 : i32
    %c0_i32_0 = arith.constant 0 : i32
    return %arg0, %arg1, %c0_i32 : i32, i32, i32
  }
  func.func @transform_1(%arg0: i32, %arg1: i32) -> (i32, i32, i32, i32) {
    %c0_i32 = arith.constant 0 : i32
    %c0_i32_0 = arith.constant 0 : i32
    %c0_i32_1 = arith.constant 0 : i32
    return %arg0, %arg1, %c0_i32, %c0_i32_0 : i32, i32, i32, i32
  }
  func.func @transform_2(%arg0: i32, %arg1: i32) -> (i32, i32) {
    %c0_i32 = arith.constant 0 : i32
    %c0_i32_0 = arith.constant 0 : i32
    %c0_i32_1 = arith.constant 0 : i32
    return %c0_i32, %c0_i32_0 : i32, i32
  }
  func.func @transform_3(%arg0: i32, %arg1: i32) -> (i32, i32) {
    %c0_i32 = arith.constant 0 : i32
    %c0_i32_0 = arith.constant 0 : i32
    %c0_i32_1 = arith.constant 0 : i32
    return %c0_i32, %c0_i32_0 : i32, i32
  }
  func.func @transform_4(%arg0: i32, %arg1: i32) -> (i32, i32, i32) {
    %c0_i32 = arith.constant 0 : i32
    %c0_i32_0 = arith.constant 0 : i32
    %c0_i32_1 = arith.constant 0 : i32
    %c0_i32_2 = arith.constant 0 : i32
    return %c0_i32, %c0_i32_0, %c0_i32_1 : i32, i32, i32
  }
  func.func @transform_5(%arg0: i32, %arg1: i32) -> (i32, i32) {
    %c0_i32 = arith.constant 0 : i32
    %c0_i32_0 = arith.constant 0 : i32
    %c0_i32_1 = arith.constant 0 : i32
    return %c0_i32, %c0_i32_0 : i32, i32
  }
  func.func @transform_6(%arg0: i32, %arg1: i32) -> (i32, i32, i32) {
    %c0_i32 = arith.constant 0 : i32
    %c0_i32_0 = arith.constant 0 : i32
    return %arg0, %arg1, %c0_i32 : i32, i32, i32
  }
}

</mosaic_0001>

<llo_original>
// kernel: tpu_custom_call.1
$region0: #{tpu_custom_call.1}
  #allocation0 [shape = 'u32[]', space=smem, size = 0x4, offset = 0x4, fixed_abs, tag = 'smem constant byte address 0x4 - core index']
  #allocation1 [shape = 'u32[72,128]{1,0:T(1,128)}', space=vmem, size = 0x9000, scoped, tag = 'internal scratch']
  #allocation2 [shape = 'f32[10,128]{1,0:T(8,128)}', space=vmem, size = 0x2000, scoped, tag = 'scratch operand']
  #allocation3 [shape = 'f32[10,64]{1,0:T(8,128)}', space=vmem, size = 0x2000, scoped, tag = 'scratch operand']
  %s0 = inlined_call_operand.hbm [shape: f32[2,16,128], index: 0, kind: input, shape index: {}]
  %s1 = inlined_call_operand.hbm [shape: f32[2,2,2,128], index: 1, kind: input, shape index: {}]
  %s2 = inlined_call_operand.vmem [shape: bf16[128,64], index: 2, kind: input, shape index: {}]
  %s3 = inlined_call_operand.vmem [shape: f32[1,64], index: 3, kind: input, shape index: {}]
  %s4 = inlined_call_operand.vmem [shape: bf16[3,64,128], index: 4, kind: input, shape index: {}]
  %s5 = inlined_call_operand.vmem [shape: f32[1,128], index: 5, kind: input, shape index: {}]
  %s6 = inlined_call_operand.hbm [shape: f32[2,16,128], index: 6, kind: output, shape index: {}]
  %s7 = sld [smem:[#allocation0]]
  $region73: #{tpu_custom_call.1} parent=0
    _
  %s9 = ssub.s32 1, %s7
  %s10 = scalar_select 0, %s9, %s7
  $region1: #{tpu_custom_call.1} parent=0
    #allocation4 [shape = 'u8[8192]{0}', space=vmem, size = 0x2000, scoped, tag = 'input window, operand 0']
    #allocation5 [shape = 's32[2]{0}', space=sflag, size = 0x8, scoped, tag = 'scoped memory for tpu_custom_call.1']
    #allocation6 [shape = 's32[2]{0}', space=sflag, size = 0x8, scoped, tag = 'scoped memory for tpu_custom_call.1']
    #allocation7 [shape = 'u8[2048]{0}', space=vmem, size = 0x800, scoped, tag = 'input window, operand 1']
    #allocation8 [shape = 's32[2]{0}', space=sflag, size = 0x8, scoped, tag = 'scoped memory for tpu_custom_call.1']
    #allocation9 [shape = 'u8[8192]{0}', space=vmem, size = 0x2000, scoped, tag = 'output window, operand 0']
    %11 = vsyncpa [#allocation5], 0
    %s12 = scalar_lea.sflag [#allocation5], 1
    %13 = vsyncpa %s12, 0
    %14 = vsyncpa [#allocation8], 0
    %s15 = scalar_lea.sflag [#allocation8], 1
    %16 = vsyncpa %s15, 0
    %17 = vsyncpa [#allocation6], 0
    %s18 = scalar_lea.sflag [#allocation6], 1
    %19 = vsyncpa %s18, 0
    loop: start=0, step=1, limit=6
    $region2: #{tpu_custom_call.1} parent=1 // loop_pre_header
      _
    $region3: #{tpu_custom_call.1} parent=1 // loop_header
      %s21 = sphi 0, %s25
      %p22 = scmp.ge.s32.totalorder %s21, 6
      %s28 = sphi 0, %s40
      %s29 = sphi 0, %s36
      %s30 = sphi 0, %s28
      %s31 = sphi 0, %s29
      %s32 = sphi 0, %s30
      %s33 = sphi 0, %s31
      %s45 = sphi 0, %s47
      %s48 = sphi 0, %s45
      %s49 = sphi 0, %s48
      %s65 = sphi 0, %s49
      %s73 = sphi 0, %s75
      %s76 = sphi 0, %s73
      %s77 = sphi 0, %s76
      %s93 = sphi 0, %s77
      %s97 = sphi 0, %s97
      %s99 = sphi 0, %s97
      %s100 = sphi 0, %s99
      %s114 = sphi 0, %s100
      %s118 = sphi 0, %s118
      %s120 = sphi 0, %s118
      %s121 = sphi 0, %s120
      %s135 = sphi 0, %s121
      %s139 = sphi 0, %s139
      %s141 = sphi 0, %s139
      %s142 = sphi 0, %s141
      %s156 = sphi 0, %s142
      %s160 = sphi 0, %s160
      %s162 = sphi 0, %s160
      %s163 = sphi 0, %s162
      %s177 = sphi 0, %s163
      %s185 = sphi 0, %s187
      %s188 = sphi 0, %s185
      %s189 = sphi 0, %s188
      %s205 = sphi 0, %s189
    $region4: #{tpu_custom_call.1} parent=1 // loop_header_branch
      %24 = sbr.rel (%p22) target = $region8
    $region5: #{tpu_custom_call.1} parent=1 // loop_body
      %s26 = ssub.s32 %s21, 1
      %s27 = ssub.s32 %s21, 2
      %s34 = sadd.s32 1, %s29
      %p35 = scmp.ge.s32.totalorder %s34, 2
      %s36 = scalar_select %p35, 0, %s34
      %s37 = sadd.s32 1, %s28
      %s38 = scalar_select %p35, %s37, %s28
      %p39 = scmp.ge.s32.totalorder %s38, 2
      %s40 = scalar_select %p39, 0, %s38
      %s41 = ssub.s32 %s28, %s40
      %s42 = ssub.s32 %s29, %s36
      %s43 = sor.u32 %s41, %s42
      %p44 = scmp.eq.s32.totalorder %s43, 0
      %s46 = sadd.s32 %s45, 1
      %s47 = scalar_select %p44, %s45, %s46
      %p50 = pneg %p44
      %p51 = scmp.eq.s32.totalorder %s21, 3
      %p52 = por %p50, %p51
      %p53 = scmp.ne.s32.totalorder %s45, %s48
      %p54 = scmp.eq.s32.totalorder %s21, 0
      %p55 = por %p53, %p54
      %p56 = scmp.ne.s32.totalorder %s45, %s48
      %p57 = scmp.eq.s32.totalorder %s26, 3
      %p58 = por %p56, %p57
      %p59 = scmp.ne.s32.totalorder %s48, %s49
      %p60 = scmp.eq.s32.totalorder %s26, 0
      %p61 = por %p59, %p60
      %p62 = scmp.ne.s32.totalorder %s48, %s49
      %p63 = scmp.eq.s32.totalorder %s27, 3
      %p64 = por %p62, %p63
      %p66 = scmp.ne.s32.totalorder %s49, %s65
      %p67 = scmp.eq.s32.totalorder %s27, 0
      %p68 = por %p66, %p67
      %s69 = ssub.s32 %s28, %s40
      %s70 = ssub.s32 %s29, %s36
      %s71 = sor.u32 %s69, %s70
      %p72 = scmp.eq.s32.totalorder %s71, 0
      %s74 = sadd.s32 %s73, 1
      %s75 = scalar_select %p72, %s73, %s74
      %p78 = pneg %p72
      %p79 = scmp.eq.s32.totalorder %s21, 3
      %p80 = por %p78, %p79
      %p81 = scmp.ne.s32.totalorder %s73, %s76
      %p82 = scmp.eq.s32.totalorder %s21, 0
      %p83 = por %p81, %p82
      %p84 = scmp.ne.s32.totalorder %s73, %s76
      %p85 = scmp.eq.s32.totalorder %s26, 3
      %p86 = por %p84, %p85
      %p87 = scmp.ne.s32.totalorder %s76, %s77
      %p88 = scmp.eq.s32.totalorder %s26, 0
      %p89 = por %p87, %p88
      %p90 = scmp.ne.s32.totalorder %s76, %s77
      %p91 = scmp.eq.s32.totalorder %s27, 3
      %p92 = por %p90, %p91
      %p94 = scmp.ne.s32.totalorder %s77, %s93
      %p95 = scmp.eq.s32.totalorder %s27, 0
      %p96 = por %p94, %p95
      %s98 = sadd.s32 %s97, 1
      %p101 = scmp.eq.s32.totalorder %s21, 3
      %p102 = scmp.ne.s32.totalorder %s97, %s99
      %p103 = scmp.eq.s32.totalorder %s21, 0
      %p104 = por %p102, %p103
      %p105 = scmp.ne.s32.totalorder %s97, %s99
      %p106 = scmp.eq.s32.totalorder %s26, 3
      %p107 = por %p105, %p106
      %p108 = scmp.ne.s32.totalorder %s99, %s100
      %p109 = scmp.eq.s32.totalorder %s26, 0
      %p110 = por %p108, %p109
      %p111 = scmp.ne.s32.totalorder %s99, %s100
      %p112 = scmp.eq.s32.totalorder %s27, 3
      %p113 = por %p111, %p112
      %p115 = scmp.ne.s32.totalorder %s100, %s114
      %p116 = scmp.eq.s32.totalorder %s27, 0
      %p117 = por %p115, %p116
      %s119 = sadd.s32 %s118, 1
      %p122 = scmp.eq.s32.totalorder %s21, 3
      %p123 = scmp.ne.s32.totalorder %s118, %s120
      %p124 = scmp.eq.s32.totalorder %s21, 0
      %p125 = por %p123, %p124
      %p126 = scmp.ne.s32.totalorder %s118, %s120
      %p127 = scmp.eq.s32.totalorder %s26, 3
      %p128 = por %p126, %p127
      %p129 = scmp.ne.s32.totalorder %s120, %s121
      %p130 = scmp.eq.s32.totalorder %s26, 0
      %p131 = por %p129, %p130
      %p132 = scmp.ne.s32.totalorder %s120, %s121
      %p133 = scmp.eq.s32.totalorder %s27, 3
      %p134 = por %p132, %p133
      %p136 = scmp.ne.s32.totalorder %s121, %s135
      %p137 = scmp.eq.s32.totalorder %s27, 0
      %p138 = por %p136, %p137
      %s140 = sadd.s32 %s139, 1
      %p143 = scmp.eq.s32.totalorder %s21, 3
      %p144 = scmp.ne.s32.totalorder %s139, %s141
      %p145 = scmp.eq.s32.totalorder %s21, 0
      %p146 = por %p144, %p145
      %p147 = scmp.ne.s32.totalorder %s139, %s141
      %p148 = scmp.eq.s32.totalorder %s26, 3
      %p149 = por %p147, %p148
      %p150 = scmp.ne.s32.totalorder %s141, %s142
      %p151 = scmp.eq.s32.totalorder %s26, 0
      %p152 = por %p150, %p151
      %p153 = scmp.ne.s32.totalorder %s141, %s142
      %p154 = scmp.eq.s32.totalorder %s27, 3
      %p155 = por %p153, %p154
      %p157 = scmp.ne.s32.totalorder %s142, %s156
      %p158 = scmp.eq.s32.totalorder %s27, 0
      %p159 = por %p157, %p158
      %s161 = sadd.s32 %s160, 1
      %p164 = scmp.eq.s32.totalorder %s21, 3
      %p165 = scmp.ne.s32.totalorder %s160, %s162
      %p166 = scmp.eq.s32.totalorder %s21, 0
      %p167 = por %p165, %p166
      %p168 = scmp.ne.s32.totalorder %s160, %s162
      %p169 = scmp.eq.s32.totalorder %s26, 3
      %p170 = por %p168, %p169
      %p171 = scmp.ne.s32.totalorder %s162, %s163
      %p172 = scmp.eq.s32.totalorder %s26, 0
      %p173 = por %p171, %p172
      %p174 = scmp.ne.s32.totalorder %s162, %s163
      %p175 = scmp.eq.s32.totalorder %s27, 3
      %p176 = por %p174, %p175
      %p178 = scmp.ne.s32.totalorder %s163, %s177
      %p179 = scmp.eq.s32.totalorder %s27, 0
      %p180 = por %p178, %p179
      %s181 = ssub.s32 %s28, %s40
      %s182 = ssub.s32 %s29, %s36
      %s183 = sor.u32 %s181, %s182
      %p184 = scmp.eq.s32.totalorder %s183, 0
      %s186 = sadd.s32 %s185, 1
      %s187 = scalar_select %p184, %s185, %s186
      %p190 = pneg %p184
      %p191 = scmp.eq.s32.totalorder %s21, 3
      %p192 = por %p190, %p191
      %p193 = scmp.ne.s32.totalorder %s185, %s188
      %p194 = scmp.eq.s32.totalorder %s21, 0
      %p195 = por %p193, %p194
      %p196 = scmp.ne.s32.totalorder %s185, %s188
      %p197 = scmp.eq.s32.totalorder %s26, 3
      %p198 = por %p196, %p197
      %p199 = scmp.ne.s32.totalorder %s188, %s189
      %p200 = scmp.eq.s32.totalorder %s26, 0
      %p201 = por %p199, %p200
      %p202 = scmp.ne.s32.totalorder %s188, %s189
      %p203 = scmp.eq.s32.totalorder %s27, 3
      %p204 = por %p202, %p203
      %p206 = scmp.ne.s32.totalorder %s189, %s205
      %p207 = scmp.eq.s32.totalorder %s27, 0
      %p208 = por %p206, %p207
      %p209 = scmp.le.s32.totalorder 1, %s21
      %p210 = scmp.lt.s32.totalorder %s21, 5
      %p211 = pnand %p209, %p210
      %p212 = pneg %p211
      // Predicated region
      $region9: #{tpu_custom_call.1} parent=5 // pred_check
        _
      $region10: #{tpu_custom_call.1} parent=5 // pred_check_branch
        %214 = sbr.rel (%p211) target = $region12
      $region11: #{tpu_custom_call.1} parent=5 // pred_region
        %s215 = ssub.s32 %s21, 1
        // Predicated region
        $region13: #{tpu_custom_call.1} parent=11 // pred_check
          %p216 = pneg %p110
        $region14: #{tpu_custom_call.1} parent=11 // pred_check_branch
          %218 = sbr.rel (%p216) target = $region16
        $region15: #{tpu_custom_call.1} parent=11 // pred_region
          _
        $region16: #{tpu_custom_call.1} parent=11 // pred_fallthru
          _
        // Predicated region
        $region17: #{tpu_custom_call.1} parent=11 // pred_check
          %p219 = pneg %p131
        $region18: #{tpu_custom_call.1} parent=11 // pred_check_branch
          %221 = sbr.rel (%p219) target = $region20
        $region19: #{tpu_custom_call.1} parent=11 // pred_region
          _
        $region20: #{tpu_custom_call.1} parent=11 // pred_fallthru
          _
        // Predicated region
        $region21: #{tpu_custom_call.1} parent=11 // pred_check
          %p222 = pneg %p152
        $region22: #{tpu_custom_call.1} parent=11 // pred_check_branch
          %224 = sbr.rel (%p222) target = $region24
        $region23: #{tpu_custom_call.1} parent=11 // pred_region
          _
        $region24: #{tpu_custom_call.1} parent=11 // pred_fallthru
          _
        // Predicated region
        $region25: #{tpu_custom_call.1} parent=11 // pred_check
          %p225 = pneg %p173
        $region26: #{tpu_custom_call.1} parent=11 // pred_check_branch
          %227 = sbr.rel (%p225) target = $region28
        $region27: #{tpu_custom_call.1} parent=11 // pred_region
          _
        $region28: #{tpu_custom_call.1} parent=11 // pred_fallthru
          _
      $region12: #{tpu_custom_call.1} parent=5 // pred_fallthru
        _
      %p228 = scmp.lt.s32.totalorder %s21, 4
      // Predicated region
      $region29: #{tpu_custom_call.1} parent=5 // pred_check
        %p229 = pneg %p228
      $region30: #{tpu_custom_call.1} parent=5 // pred_check_branch
        %231 = sbr.rel (%p229) target = $region32
      $region31: #{tpu_custom_call.1} parent=5 // pred_region
        // Predicated region
        $region33: #{tpu_custom_call.1} parent=31 // pred_check
          %p232 = pneg %p55
        $region34: #{tpu_custom_call.1} parent=31 // pred_check_branch
          %234 = sbr.rel (%p232) target = $region36
        $region35: #{tpu_custom_call.1} parent=31 // pred_region
          %s235 = sand.u32 %s45, 1
          %s236 = scalar_lea.sflag [#allocation5], %s235
          %s237 = sand.u32 %s45, 1
          %s238 = smul.addr %s237, 8
          %s239 = scalar_lea.vmem [#allocation4], %s238
          %241 = vsyncadd %s236, 0
          %s242 = smul.addr %s28, 2
          %s243 = sadd.s32 %s29, %s242
          %s244 = smul.addr %s243, 8
          %s245 = scalar_lea.hbm %s0, %s244
          %s247 = sshll.u32 %s245, 4
          %s248 = int_to_ptr.hbm [resolvable:$true] %s247
          %s249 = sshll.u32 %s239, 4
          %s250 = int_to_ptr.vmem [resolvable:$true] %s249
          %252 = dma.hbm_to_vmem [thread:$0]  %s248, 128, %s250, %s236
        $region36: #{tpu_custom_call.1} parent=31 // pred_fallthru
          _
        // Predicated region
        $region37: #{tpu_custom_call.1} parent=31 // pred_check
          %p253 = pneg %p83
        $region38: #{tpu_custom_call.1} parent=31 // pred_check_branch
          %255 = sbr.rel (%p253) target = $region40
        $region39: #{tpu_custom_call.1} parent=31 // pred_region
          %s256 = sand.u32 %s73, 1
          %s257 = scalar_lea.sflag [#allocation8], %s256
          %s258 = sand.u32 %s73, 1
          %s259 = smul.addr %s258, 2
          %s260 = scalar_lea.vmem [#allocation7], %s259
          %262 = vsyncadd %s257, 0
          %s263 = smul.addr %s28, 2
          %s264 = sadd.s32 %s29, %s263
          %s265 = smul.addr %s264, 2
          %s266 = scalar_lea.hbm %s1, %s265
          %s268 = sshll.u32 %s266, 4
          %s269 = int_to_ptr.hbm [resolvable:$true] %s268
          %s270 = sshll.u32 %s260, 4
          %s271 = int_to_ptr.vmem [resolvable:$true] %s270
          %273 = dma.hbm_to_vmem [thread:$0]  %s269, 32, %s271, %s257
        $region40: #{tpu_custom_call.1} parent=31 // pred_fallthru
          _
      $region32: #{tpu_custom_call.1} parent=5 // pred_fallthru
        _
      %p274 = scmp.le.s32.totalorder 1, %s21
      %p275 = scmp.lt.s32.totalorder %s21, 5
      %p276 = pnand %p274, %p275
      %p277 = pneg %p276
      // Predicated region
      $region41: #{tpu_custom_call.1} parent=5 // pred_check
        _
      $region42: #{tpu_custom_call.1} parent=5 // pred_check_branch
        %279 = sbr.rel (%p276) target = $region44
      $region43: #{tpu_custom_call.1} parent=5 // pred_region
        %s280 = ssub.s32 %s21, 1
        %s281 = sand.u32 %s48, 1
        %s282 = scalar_lea.sflag [#allocation5], %s281
        %s283 = sand.u32 %s48, 1
        %s284 = smul.addr %s283, 8
        %s285 = scalar_lea.vmem [#allocation4], %s284
        // Predicated region
        $region45: #{tpu_custom_call.1} parent=43 // pred_check
          %p286 = pneg %p61
        $region46: #{tpu_custom_call.1} parent=43 // pred_check_branch
          %288 = sbr.rel (%p286) target = $region48
        $region47: #{tpu_custom_call.1} parent=43 // pred_region
          %290 = dma.done %s282, 128
        $region48: #{tpu_custom_call.1} parent=43 // pred_fallthru
          _
        %s291 = sand.u32 %s76, 1
        %s292 = scalar_lea.sflag [#allocation8], %s291
        %s293 = sand.u32 %s76, 1
        %s294 = smul.addr %s293, 2
        %s295 = scalar_lea.vmem [#allocation7], %s294
        // Predicated region
        $region49: #{tpu_custom_call.1} parent=43 // pred_check
          %p296 = pneg %p89
        $region50: #{tpu_custom_call.1} parent=43 // pred_check_branch
          %298 = sbr.rel (%p296) target = $region52
        $region51: #{tpu_custom_call.1} parent=43 // pred_region
          %300 = dma.done %s292, 32
        $region52: #{tpu_custom_call.1} parent=43 // pred_fallthru
          _
        %s301 = sand.u32 %s48, 1
        %s302 = scalar_lea.sflag [#allocation5], %s301
        %s303 = sand.u32 %s48, 1
        %s304 = smul.addr %s303, 8
        %s305 = scalar_lea.vmem [#allocation4], %s304
        %p306 = pneg %p61
        %p307 = pneg %p58
        %s308 = sand.u32 %s76, 1
        %s309 = scalar_lea.sflag [#allocation8], %s308
        %s310 = sand.u32 %s76, 1
        %s311 = smul.addr %s310, 2
        %s312 = scalar_lea.vmem [#allocation7], %s311
        %p313 = pneg %p89
        %p314 = pneg %p86
        %p315 = pneg %p110
        %p316 = pneg %p107
        %p317 = pneg %p131
        %p318 = pneg %p128
        %p319 = pneg %p152
        %p320 = pneg %p149
        %p321 = pneg %p173
        %p322 = pneg %p170
        %p323 = pneg %p201
        %p324 = pneg %p198
        %s325 = sand.u32 %s188, 1
        %s326 = scalar_lea.sflag [#allocation6], %s325
        %s327 = sand.u32 %s188, 1
        %s328 = smul.addr %s327, 8
        %s329 = scalar_lea.vmem [#allocation9], %s328
        %v331 = vld [vmem:[%s285] sm:$0xff]
        %v332 = vld [vmem:[%s295] sm:$0x3]
        %333 = vst [vmem:[#allocation2 + $0x1] sm:$0xff] %v331
        %334 = vst [vmem:[#allocation2] sm:$0x1] %v332
        %335 = vst [vmem:[#allocation2 + $0x8] sm:$0x2] %v332
        %v336 = vld [vmem:[#allocation2] sm:$0xff]
        %v337 = vld [vmem:[#allocation2 + $0x8] sm:$0x3]
        %v338 = vpack.c.bf16 %v337, %v336
        %v339 = vld [vmem:[%s2] sm:$0xf]
        %v340 = vld [vmem:[%s2 + $0x4] sm:$0xf]
        %v341 = vld [vmem:[%s2 + $0x8] sm:$0xf]
        %v342 = vld [vmem:[%s2 + $0xc] sm:$0xf]
        %v343 = vld [vmem:[%s2 + $0x10] sm:$0xf]
        %v344 = vld [vmem:[%s2 + $0x14] sm:$0xf]
        %v345 = vld [vmem:[%s2 + $0x18] sm:$0xf]
        %v346 = vld [vmem:[%s2 + $0x1c] sm:$0xf]
        %v347 = vld [vmem:[%s2 + $0x20] sm:$0xf]
        %v348 = vld [vmem:[%s2 + $0x24] sm:$0xf]
        %v349 = vld [vmem:[%s2 + $0x28] sm:$0xf]
        %v350 = vld [vmem:[%s2 + $0x2c] sm:$0xf]
        %v351 = vld [vmem:[%s2 + $0x30] sm:$0xf]
        %v352 = vld [vmem:[%s2 + $0x34] sm:$0xf]
        %v353 = vld [vmem:[%s2 + $0x38] sm:$0xf]
        %v354 = vld [vmem:[%s2 + $0x3c] sm:$0xf]
        %v355 = vld [vmem:[%s3] sm:$0x1]
        %v357 = vperm.slane %v355, 0
        %v375 = vunpack.c.l.b16 %v339
        %v376 = vunpack.c.l.b16 %v340
        %v377 = vunpack.c.l.b16 %v341
        %v378 = vunpack.c.l.b16 %v342
        %v379 = vunpack.c.l.b16 %v343
        %v380 = vunpack.c.l.b16 %v344
        %v381 = vunpack.c.l.b16 %v345
        %v382 = vunpack.c.l.b16 %v346
        %v383 = vunpack.c.l.b16 %v347
        %v384 = vunpack.c.l.b16 %v348
        %v385 = vunpack.c.l.b16 %v349
        %v386 = vunpack.c.l.b16 %v350
        %v387 = vunpack.c.l.b16 %v351
        %v388 = vunpack.c.l.b16 %v352
        %v389 = vunpack.c.l.b16 %v353
        %v390 = vunpack.c.l.b16 %v354
        %v391 = vpack.c.b16 %v376, %v375
        %v392 = vpack.c.b16 %v378, %v377
        %v393 = vpack.c.b16 %v380, %v379
        %v394 = vpack.c.b16 %v382, %v381
        %v395 = vpack.c.b16 %v384, %v383
        %v396 = vpack.c.b16 %v386, %v385
        %v397 = vpack.c.b16 %v388, %v387
        %v398 = vpack.c.b16 %v390, %v389
        %407 = vmatpush.bf16.msra.mxu0 %v398
        %408 = vmatpush.bf16.msra.mxu0 %v397
        %409 = vmatpush.bf16.msra.mxu0 %v396
        %410 = vmatpush.bf16.msra.mxu0 %v395
        %411 = vmatpush.bf16.msra.mxu0 %v394
        %412 = vmatpush.bf16.msra.mxu0 %v393
        %413 = vmatpush.bf16.msra.mxu0 %v392
        %414 = vmatpush.bf16.msra.mxu0 %v391
        %415 = vmatmul.bf16.gmra.mxu0 %v338
        %v416 = vpop.f32.mrf.mxu0
        %v417 = vadd.f32 %v357, %v416
        %v418 = vpop.f32.mrf.mxu0
        %v419 = vadd.f32 %v357, %v418
        %420 = vdwg.mxu0
        %vm421 = vcmp.ge.f32.partialorder %v417, 0.0
        %vm422 = vcmp.ge.f32.partialorder %v419, 0.0
        %v423 = vmul.f32 %v417, 0.1
        %v424 = vmul.f32 %v419, 0.1
        %v425 = vsel %vm421, %v417, %v423
        %v426 = vsel %vm422, %v419, %v424
        %vm427 = vcmask 523264
        %428 = vst.msk [vmem:[#allocation3] sm:$0xff] %vm427, %v425
        %vm429 = vcmask 517120
        %430 = vst.msk [vmem:[#allocation3 + $0x8] sm:$0x3] %vm429, %v426
        %p431 = scmp.eq.s32.totalorder %s31, 0
        // Predicated region
        $region53: #{tpu_custom_call.1} parent=43 // pred_check
          %p432 = pneg %p431
        $region54: #{tpu_custom_call.1} parent=43 // pred_check_branch
          %434 = sbr.rel (%p432) target = $region56
        $region55: #{tpu_custom_call.1} parent=43 // pred_region
          %vm435 = vcmask 516096
          %436 = vst.msk [vmem:[#allocation3] sm:$0x1] %vm435, 0.0
        $region56: #{tpu_custom_call.1} parent=43 // pred_fallthru
          _
        %p437 = scmp.eq.s32.totalorder %s31, 1
        // Predicated region
        $region57: #{tpu_custom_call.1} parent=43 // pred_check
          %p438 = pneg %p437
        $region58: #{tpu_custom_call.1} parent=43 // pred_check_branch
          %440 = sbr.rel (%p438) target = $region60
        $region59: #{tpu_custom_call.1} parent=43 // pred_region
          %vm441 = vcmask 516096
          %442 = vst.msk [vmem:[#allocation3 + $0x9] sm:$0x1] %vm441, 0.0
        $region60: #{tpu_custom_call.1} parent=43 // pred_fallthru
          _
        %v443 = vld [vmem:[#allocation3] sm:$0xff]
        %v444 = vpack.c.bf16 %v443, %v443
        %v445 = vld [vmem:[%s4] sm:$0xf]
        %v446 = vld [vmem:[%s4 + $0x4] sm:$0xf]
        %v447 = vld [vmem:[%s4 + $0x8] sm:$0xf]
        %v448 = vld [vmem:[%s4 + $0xc] sm:$0xf]
        %v449 = vld [vmem:[%s4 + $0x10] sm:$0xf]
        %v450 = vld [vmem:[%s4 + $0x14] sm:$0xf]
        %v451 = vld [vmem:[%s4 + $0x18] sm:$0xf]
        %v452 = vld [vmem:[%s4 + $0x1c] sm:$0xf]
        %v453 = vld [vmem:[#allocation3 + $0x1] sm:$0xff]
        %v454 = vpack.c.bf16 %v453, %v453
        %s455 = scalar_lea.vmem %s4, 32
        %v456 = vld [vmem:[%s455] sm:$0xf]
        %v457 = vld [vmem:[%s455 + $0x4] sm:$0xf]
        %v458 = vld [vmem:[%s455 + $0x8] sm:$0xf]
        %v459 = vld [vmem:[%s455 + $0xc] sm:$0xf]
        %v460 = vld [vmem:[%s455 + $0x10] sm:$0xf]
        %v461 = vld [vmem:[%s455 + $0x14] sm:$0xf]
        %v462 = vld [vmem:[%s455 + $0x18] sm:$0xf]
        %v463 = vld [vmem:[%s455 + $0x1c] sm:$0xf]
        %v472 = vunpack.c.l.b16 %v456
        %v473 = vunpack.c.l.b16 %v457
        %v474 = vunpack.c.l.b16 %v458
        %v475 = vunpack.c.l.b16 %v459
        %v476 = vunpack.c.l.b16 %v460
        %v477 = vunpack.c.l.b16 %v461
        %v478 = vunpack.c.l.b16 %v462
        %v479 = vunpack.c.l.b16 %v463
        %v480 = vpack.c.b16 %v473, %v472
        %v481 = vpack.c.b16 %v475, %v474
        %v482 = vpack.c.b16 %v477, %v476
        %v483 = vpack.c.b16 %v479, %v478
        %v489 = vsel %vm427, %v454, 0
        %491 = vmatpush.bf16.msra.mxu0 0
        %492 = vmatpush.bf16.msra.mxu0 0
        %493 = vmatpush.bf16.msra.mxu0 0
        %494 = vmatpush.bf16.msra.mxu0 0
        %495 = vmatpush.bf16.msra.mxu0 %v483
        %496 = vmatpush.bf16.msra.mxu0 %v482
        %497 = vmatpush.bf16.msra.mxu0 %v481
        %498 = vmatpush.bf16.msra.mxu0 %v480
        %499 = vmatmul.bf16.gmra.mxu0 %v489
        %v500 = vpop.f32.mrf.mxu0
        %v501 = vadd.f32 0.0, %v500
        %v502 = vpop.f32.mrf.mxu0
        %503 = vdwg.mxu0
        %v512 = vunpack.c.l.b16 %v445
        %v513 = vunpack.c.l.b16 %v446
        %v514 = vunpack.c.l.b16 %v447
        %v515 = vunpack.c.l.b16 %v448
        %v516 = vunpack.c.l.b16 %v449
        %v517 = vunpack.c.l.b16 %v450
        %v518 = vunpack.c.l.b16 %v451
        %v519 = vunpack.c.l.b16 %v452
        %v520 = vpack.c.b16 %v513, %v512
        %v521 = vpack.c.b16 %v515, %v514
        %v522 = vpack.c.b16 %v517, %v516
        %v523 = vpack.c.b16 %v519, %v518
        %v529 = vsel %vm427, %v444, 0
        %531 = vmatpush.bf16.msra.mxu0 0
        %532 = vmatpush.bf16.msra.mxu0 0
        %533 = vmatpush.bf16.msra.mxu0 0
        %534 = vmatpush.bf16.msra.mxu0 0
        %535 = vmatpush.bf16.msra.mxu0 %v523
        %536 = vmatpush.bf16.msra.mxu0 %v522
        %537 = vmatpush.bf16.msra.mxu0 %v521
        %538 = vmatpush.bf16.msra.mxu0 %v520
        %539 = vmatmul.bf16.gmra.mxu0 %v529
        %v540 = vpop.f32.mrf.mxu0
        %v541 = vadd.f32 %v501, %v540
        %v542 = vpop.f32.mrf.mxu0
        %543 = vdwg.mxu0
        %v544 = vld [vmem:[#allocation3 + $0x2] sm:$0xff]
        %v545 = vpack.c.bf16 %v544, %v544
        %s546 = scalar_lea.vmem %s4, 64
        %v547 = vld [vmem:[%s546] sm:$0xf]
        %v548 = vld [vmem:[%s546 + $0x4] sm:$0xf]
        %v549 = vld [vmem:[%s546 + $0x8] sm:$0xf]
        %v550 = vld [vmem:[%s546 + $0xc] sm:$0xf]
        %v551 = vld [vmem:[%s546 + $0x10] sm:$0xf]
        %v552 = vld [vmem:[%s546 + $0x14] sm:$0xf]
        %v553 = vld [vmem:[%s546 + $0x18] sm:$0xf]
        %v554 = vld [vmem:[%s546 + $0x1c] sm:$0xf]
        %v563 = vunpack.c.l.b16 %v547
        %v564 = vunpack.c.l.b16 %v548
        %v565 = vunpack.c.l.b16 %v549
        %v566 = vunpack.c.l.b16 %v550
        %v567 = vunpack.c.l.b16 %v551
        %v568 = vunpack.c.l.b16 %v552
        %v569 = vunpack.c.l.b16 %v553
        %v570 = vunpack.c.l.b16 %v554
        %v571 = vpack.c.b16 %v564, %v563
        %v572 = vpack.c.b16 %v566, %v565
        %v573 = vpack.c.b16 %v568, %v567
        %v574 = vpack.c.b16 %v570, %v569
        %v580 = vsel %vm427, %v545, 0
        %582 = vmatpush.bf16.msra.mxu0 0
        %583 = vmatpush.bf16.msra.mxu0 0
        %584 = vmatpush.bf16.msra.mxu0 0
        %585 = vmatpush.bf16.msra.mxu0 0
        %586 = vmatpush.bf16.msra.mxu0 %v574
        %587 = vmatpush.bf16.msra.mxu0 %v573
        %588 = vmatpush.bf16.msra.mxu0 %v572
        %589 = vmatpush.bf16.msra.mxu0 %v571
        %590 = vmatmul.bf16.gmra.mxu0 %v580
        %v591 = vpop.f32.mrf.mxu0
        %v592 = vadd.f32 0.0, %v591
        %v593 = vpop.f32.mrf.mxu0
        %594 = vdwg.mxu0
        %v595 = vadd.f32 %v541, %v592
        %v596 = vld [vmem:[%s5] sm:$0x1]
        %v598 = vperm.slane %v596, 0
        %v600 = vadd.f32 %v595, %v598
        %vm601 = vcmp.ge.f32.partialorder %v600, 0.0
        %v602 = vmul.f32 %v600, 0.1
        %v603 = vsel %vm601, %v600, %v602
        %v604 = vadd.f32 %v603, %v331
        %605 = vst [vmem:[%s329] sm:$0xff] %v604
        %s606 = sand.u32 %s188, 1
        %s607 = scalar_lea.sflag [#allocation6], %s606
        %s608 = sand.u32 %s188, 1
        %s609 = smul.addr %s608, 8
        %s610 = scalar_lea.vmem [#allocation9], %s609
        // Predicated region
        $region61: #{tpu_custom_call.1} parent=43 // pred_check
          %p611 = pneg %p198
        $region62: #{tpu_custom_call.1} parent=43 // pred_check_branch
          %613 = sbr.rel (%p611) target = $region64
        $region63: #{tpu_custom_call.1} parent=43 // pred_region
          %615 = vsyncadd %s607, 0
          %s616 = smul.addr %s30, 2
          %s617 = sadd.s32 %s31, %s616
          %s618 = smul.addr %s617, 8
          %s619 = scalar_lea.hbm %s6, %s618
          %s621 = sshll.u32 %s610, 4
          %s622 = int_to_ptr.vmem [resolvable:$true] %s621
          %s623 = sshll.u32 %s619, 4
          %s624 = int_to_ptr.hbm [resolvable:$true] %s623
          %626 = dma.vmem_to_hbm [thread:$0]  %s622, 128, %s624, %s607
        $region64: #{tpu_custom_call.1} parent=43 // pred_fallthru
          _
      $region44: #{tpu_custom_call.1} parent=5 // pred_fallthru
        _
      %p627 = scmp.le.s32.totalorder 2, %s21
      // Predicated region
      $region65: #{tpu_custom_call.1} parent=5 // pred_check
        %p628 = pneg %p627
      $region66: #{tpu_custom_call.1} parent=5 // pred_check_branch
        %630 = sbr.rel (%p628) target = $region68
      $region67: #{tpu_custom_call.1} parent=5 // pred_region
        %s631 = ssub.s32 %s21, 2
        // Predicated region
        $region69: #{tpu_custom_call.1} parent=67 // pred_check
          %p632 = pneg %p204
        $region70: #{tpu_custom_call.1} parent=67 // pred_check_branch
          %634 = sbr.rel (%p632) target = $region72
        $region71: #{tpu_custom_call.1} parent=67 // pred_region
          %s635 = sand.u32 %s189, 1
          %s636 = scalar_lea.sflag [#allocation6], %s635
          %s637 = sand.u32 %s189, 1
          %s638 = smul.addr %s637, 8
          %s639 = scalar_lea.vmem [#allocation9], %s638
          %641 = dma.done %s636, 128
        $region72: #{tpu_custom_call.1} parent=67 // pred_fallthru
          _
      $region68: #{tpu_custom_call.1} parent=5 // pred_fallthru
        _
    $region6: #{tpu_custom_call.1} parent=1 // loop_footer
      %s25 = sadd.s32 1, %s21
    $region7: #{tpu_custom_call.1} parent=1 // loop_footer_branch
      %20 = sbr.rel target = $region3
    $region8: #{tpu_custom_call.1} parent=1 // loop_exit
      _
    %642 = vsyncpa [#allocation5], 1
    %s643 = scalar_lea.sflag [#allocation5], 1
    %644 = vsyncpa %s643, 1
    %645 = vsyncpa [#allocation8], 1
    %s646 = scalar_lea.sflag [#allocation8], 1
    %647 = vsyncpa %s646, 1
    %648 = vsyncpa [#allocation6], 1
    %s649 = scalar_lea.sflag [#allocation6], 1
    %650 = vsyncpa %s649, 1

</llo_original>
